<compile_context>
chip_gen: v7x
topology: tpu7x:2x2x1
jax: 0.10.0
libtpu: 0.0.40
codegen_flags: <defaults>
</compile_context>

<pallas_src>
import jax
import jax.numpy as jnp
from jax.experimental import pallas as pl
from jax.experimental.pallas import tpu as pltpu
from typing import NamedTuple


class DiagonalGaussian(NamedTuple):
    # TODO(synk): the original module returns distribution.DiagonalGaussian;
    # only its (mu, logvar) parameters are produced here — sampling / log_prob
    # methods are outside the forward pass and have no kernel equivalent.
    mu: jax.Array
    logvar: jax.Array


def _encoder_kernel(x_ref, w0_ref, b0_ref, w1_ref, b1_ref, wh_ref, bh_ref,
                    out_ref):
    """Fused MLP encoder: two ReLU hidden layers + identity-augmented head.

    The head weight is [I | Wmu^T | Wlv^T] so one MXU matmul and ONE
    lane-contiguous store produce the whole [h | mu | logvar] output slab.
    """
    x = x_ref[...]                                                   # (bb, in)

    h0 = jnp.dot(x, w0_ref[...], preferred_element_type=jnp.float32)
    h0 = jnp.maximum(h0 + b0_ref[...], 0.0)                          # (bb, h)

    h1 = jnp.dot(h0, w1_ref[...], preferred_element_type=jnp.float32)
    h1 = jnp.maximum(h1 + b1_ref[...], 0.0)                          # (bb, h)

    out = jnp.dot(h1, wh_ref[...], preferred_element_type=jnp.float32)
    out_ref[...] = (out + bh_ref[...]).astype(out_ref.dtype)         # (bb, h+2z)


def prepare_base_encoder_params(w0, b0, w1, b1, wmu, bmu, wlv, blv):
    """One-time parameter prep (hoisted out of the per-call path).

    Transposes PyTorch-layout (out, in) weights to (in, out) and builds the
    identity-augmented fused head [I | Wmu^T | Wlv^T] with bias [0 | bmu | blv].
    """
    f32 = jnp.float32
    h_dim = w0.shape[0]
    w0t = jnp.asarray(w0, f32).T                                      # (in, h)
    w1t = jnp.asarray(w1, f32).T                                      # (h, h)
    wz = jnp.concatenate([jnp.asarray(wmu, f32),
                          jnp.asarray(wlv, f32)], axis=0).T           # (h, 2z)
    whead = jnp.concatenate([jnp.eye(h_dim, dtype=f32), wz], axis=1)  # (h, h+2z)
    bhead = jnp.concatenate([jnp.zeros((h_dim,), f32),
                             jnp.asarray(bmu, f32),
                             jnp.asarray(blv, f32)]).reshape(1, -1)   # (1, h+2z)
    b0r = jnp.asarray(b0, f32).reshape(1, -1)
    b1r = jnp.asarray(b1, f32).reshape(1, -1)
    return (w0t, b0r, w1t, b1r, whead, bhead)


def _round_up(a, m):
    return ((a + m - 1) // m) * m


def _select_block_b(B, in_dim, h_dim, out_w):
    """Pick a batch tile that fits the per-generation scoped-VMEM budget."""
    kind = ""
    try:
        kind = jax.devices()[0].device_kind.lower()
    except Exception:
        pass
    is_v7 = ("v7" in kind) or ("7x" in kind)
    if ("v6" in kind) or is_v7:
        budget, max_b = 28 << 20, 2048      # default scoped VMEM = 32 MiB
    else:
        budget, max_b = 12 << 20, 1024      # v5e / unknown: default = 16 MiB

    # Double-buffered resident params + per-row cost of double-buffered
    # x tile and fused output tile (4 bytes/elem).
    fixed = 2 * 4 * (in_dim * h_dim + h_dim * h_dim + h_dim * out_w
                     + 2 * h_dim + out_w)
    per_row = 2 * 4 * (in_dim + out_w)
    avail = max(budget - fixed, per_row * 8)
    block_b = max(8, min(max_b, (avail // per_row) // 8 * 8))
    # TODO(synk): if in_dim ever grows so large that even block_b=8 exceeds
    # VMEM, add a K grid axis over in_dim with a VMEM f32 accumulator.

    if is_v7:
        # Guarantee >=2 grid steps whenever B spans more than one block so the
        # "parallel" batch axis shards across both v7x TensorCores.
        block_b = min(block_b, max(8, _round_up(pl.cdiv(B, 2), 8)))
    return block_b


def base_encoder_forward(x, params, *, max_block_b=None):
    """Pallas wrapper for BaseEncoder.forward.

    Args:
      x:      (B, in_dim) float32 (already flattened, as the module expects).
      params: output of prepare_base_encoder_params (call once at load time).
    Returns:
      (DiagonalGaussian(mu, logvar), h) with mu/logvar (B, z_dim), h (B, h_dim)
    """
    w0t, b0r, w1t, b1r, whead, bhead = params
    x = jnp.asarray(x, jnp.float32)
    B, in_dim = x.shape
    h_dim = w0t.shape[1]
    out_w = whead.shape[1]                      # h_dim + 2 * z_dim
    z_dim = (out_w - h_dim) // 2

    block_b = _select_block_b(B, in_dim, h_dim, out_w)
    if max_block_b is not None:
        block_b = min(block_b, max(8, (max_block_b // 8) * 8))
    if block_b >= B:
        block_b = B                             # single full-resident block
    # Ragged last block is handled by Pallas output-row masking; no jnp.pad.
    grid = (pl.cdiv(B, block_b),)

    batched = lambda i: (i, 0)                  # activations: tile along batch
    full = lambda i: (0, 0)                     # parameters: same block always

    out = pl.pallas_call(
        _encoder_kernel,
        out_shape=jax.ShapeDtypeStruct((B, out_w), jnp.float32),
        grid=grid,
        in_specs=[
            pl.BlockSpec((block_b, in_dim), batched),
            pl.BlockSpec((in_dim, h_dim), full),
            pl.BlockSpec((1, h_dim), full),
            pl.BlockSpec((h_dim, h_dim), full),
            pl.BlockSpec((1, h_dim), full),
            pl.BlockSpec((h_dim, out_w), full),
            pl.BlockSpec((1, out_w), full),
        ],
        out_specs=pl.BlockSpec((block_b, out_w), batched),
        compiler_params=pltpu.CompilerParams(
            dimension_semantics=("parallel",)),
    )(x, w0t, b0r, w1t, b1r, whead, bhead)

    h = out[:, :h_dim]
    mu = out[:, h_dim:h_dim + z_dim]
    logvar = out[:, h_dim + z_dim:]
    return DiagonalGaussian(mu, logvar), h


def base_encoder_ref(x, w0, b0, w1, b1, wmu, bmu, wlv, blv):
    """Pure-JAX reference matching the PyTorch forward exactly."""
    h = jnp.maximum(x @ w0.T + b0, 0.0)
    h = jnp.maximum(h @ w1.T + b1, 0.0)
    mu = h @ wmu.T + bmu
    logvar = h @ wlv.T + blv
    return mu, logvar, h


if __name__ == "__main__":
    # Shapes implied by the module: x_dim = (C, H, W); linear_hidden0 consumes
    # the flattened C*H*W input.
    B = 2
    X_DIM = (4, 16, 16)                        # (channels, H, W)
    IN_DIM = X_DIM[0] * X_DIM[1] * X_DIM[2]    # 1024
    H_DIM = 32
    Z_DIM = 8

    key = jax.random.PRNGKey(0)
    key, kx = jax.random.split(key)
    x_img = jax.random.normal(kx, (B,) + X_DIM, dtype=jnp.float32)
    x = x_img.reshape(B, -1)                   # module expects flattened input

    def linear_init(key, out_dim, in_dim):
        kw, kb = jax.random.split(key)
        bound = 1.0 / (in_dim ** 0.5)
        w = jax.random.uniform(kw, (out_dim, in_dim), minval=-bound,
                               maxval=bound, dtype=jnp.float32)
        b = jax.random.uniform(kb, (out_dim,), minval=-bound,
                               maxval=bound, dtype=jnp.float32)
        return w, b

    key, k0, k1, kmu, klv = jax.random.split(key, 5)
    w0, b0 = linear_init(k0, H_DIM, IN_DIM)
    w1, b1 = linear_init(k1, H_DIM, H_DIM)
    wmu, bmu = linear_init(kmu, Z_DIM, H_DIM)
    wlv, blv = linear_init(klv, Z_DIM, H_DIM)

    # One-time parameter prep (hoisted out of the per-call path).
    params = prepare_base_encoder_params(w0, b0, w1, b1, wmu, bmu, wlv, blv)

    # --- Test 1: small spec-shaped batch (single full-resident block) -------
    dist, h = base_encoder_forward(x, params)
    (mu, logvar), h = jax.block_until_ready((dist, h))
    mu_ref, logvar_ref, h_ref = base_encoder_ref(
        x, w0, b0, w1, b1, wmu, bmu, wlv, blv)

    assert mu.shape == (B, Z_DIM) and logvar.shape == (B, Z_DIM)
    assert h.shape == (B, H_DIM)
    assert jnp.allclose(mu, mu_ref, rtol=1e-5, atol=1e-5), "mu mismatch"
    assert jnp.allclose(logvar, logvar_ref, rtol=1e-5, atol=1e-5), "logvar mismatch"
    assert jnp.allclose(h, h_ref, rtol=1e-5, atol=1e-5), "h mismatch"

    # --- Test 2: ragged multi-block batch (exercises masked last block + the
    # parallel batch grid; no wrapper-side padding anywhere) ------------------
    key, kbig = jax.random.split(key)
    B2 = 1000
    x2 = jax.random.normal(kbig, (B2, IN_DIM), dtype=jnp.float32)
    dist2, h2 = base_encoder_forward(x2, params, max_block_b=128)
    (mu2, logvar2), h2 = jax.block_until_ready((dist2, h2))
    mu2_ref, logvar2_ref, h2_ref = base_encoder_ref(
        x2, w0, b0, w1, b1, wmu, bmu, wlv, blv)

    assert mu2.shape == (B2, Z_DIM) and logvar2.shape == (B2, Z_DIM)
    assert h2.shape == (B2, H_DIM)
    assert jnp.allclose(mu2, mu2_ref, rtol=1e-5, atol=1e-5), "mu mismatch (ragged)"
    assert jnp.allclose(logvar2, logvar2_ref, rtol=1e-5, atol=1e-5), "logvar mismatch (ragged)"
    assert jnp.allclose(h2, h2_ref, rtol=1e-5, atol=1e-5), "h mismatch (ragged)"

    print("KERNEL_OK")
</pallas_src>

<mosaic_0001>
module attributes {stable_mosaic.version = 11 : i64} {
  func.func @_encoder_kernel(%arg0: i32, %arg1: memref<2x1024xf32, #tpu.memory_space<vmem>>, %arg2: memref<1024x32xf32, #tpu.memory_space<vmem>>, %arg3: memref<1x32xf32, #tpu.memory_space<vmem>>, %arg4: memref<32x32xf32, #tpu.memory_space<vmem>>, %arg5: memref<1x32xf32, #tpu.memory_space<vmem>>, %arg6: memref<32x48xf32, #tpu.memory_space<vmem>>, %arg7: memref<1x48xf32, #tpu.memory_space<vmem>>, %arg8: memref<2x48xf32, #tpu.memory_space<vmem>>) attributes {dimension_semantics = [#tpu.dimension_semantics<parallel>], iteration_bounds = array<i64: 1>, scalar_prefetch = 0 : i64, scratch_operands = 0 : i64, tpu.core_type = #tpu.core_type<tc>, window_params = [{transform_indices = @transform_0, window_bounds = array<i64: 2, 1024>}, {pipeline_mode = #tpu.pipeline_mode<synchronous>, transform_indices = @transform_1, window_bounds = array<i64: 1024, 32>}, {pipeline_mode = #tpu.pipeline_mode<synchronous>, transform_indices = @transform_2, window_bounds = array<i64: 1, 32>}, {pipeline_mode = #tpu.pipeline_mode<synchronous>, transform_indices = @transform_3, window_bounds = array<i64: 32, 32>}, {pipeline_mode = #tpu.pipeline_mode<synchronous>, transform_indices = @transform_4, window_bounds = array<i64: 1, 32>}, {pipeline_mode = #tpu.pipeline_mode<synchronous>, transform_indices = @transform_5, window_bounds = array<i64: 32, 48>}, {pipeline_mode = #tpu.pipeline_mode<synchronous>, transform_indices = @transform_6, window_bounds = array<i64: 1, 48>}, {transform_indices = @transform_7, window_bounds = array<i64: 2, 48>}]} {
    %c0 = arith.constant 0 : index
    %c0_0 = arith.constant 0 : index
    %0 = vector.load %arg1[%c0, %c0_0] : memref<2x1024xf32, #tpu.memory_space<vmem>>, vector<2x1024xf32>
    %c0_1 = arith.constant 0 : index
    %c0_2 = arith.constant 0 : index
    %1 = vector.load %arg2[%c0_1, %c0_2] : memref<1024x32xf32, #tpu.memory_space<vmem>>, vector<1024x32xf32>
    %cst = arith.constant dense<0.000000e+00> : vector<2x32xf32>
    %2 = tpu.matmul %0, %1, %cst {dimension_numbers = #tpu.dot_dimension_numbers<[1], [0], [0], [1], [0, 0, 1, 1], [], []>} : vector<2x1024xf32>, vector<1024x32xf32>, vector<2x32xf32> -> vector<2x32xf32>
    %c0_3 = arith.constant 0 : index
    %c0_4 = arith.constant 0 : index
    %3 = vector.load %arg3[%c0_3, %c0_4] : memref<1x32xf32, #tpu.memory_space<vmem>>, vector<1x32xf32>
    %4 = vector.broadcast %3 : vector<1x32xf32> to vector<2x32xf32>
    %5 = arith.addf %2, %4 : vector<2x32xf32>
    %cst_5 = arith.constant 0.000000e+00 : f32
    %6 = vector.broadcast %cst_5 : f32 to vector<2x32xf32>
    %7 = arith.maximumf %5, %6 : vector<2x32xf32>
    %c0_6 = arith.constant 0 : index
    %c0_7 = arith.constant 0 : index
    %8 = vector.load %arg4[%c0_6, %c0_7] : memref<32x32xf32, #tpu.memory_space<vmem>>, vector<32x32xf32>
    %cst_8 = arith.constant dense<0.000000e+00> : vector<2x32xf32>
    %9 = tpu.matmul %7, %8, %cst_8 {dimension_numbers = #tpu.dot_dimension_numbers<[1], [0], [0], [1], [0, 0, 1, 1], [], []>} : vector<2x32xf32>, vector<32x32xf32>, vector<2x32xf32> -> vector<2x32xf32>
    %c0_9 = arith.constant 0 : index
    %c0_10 = arith.constant 0 : index
    %10 = vector.load %arg5[%c0_9, %c0_10] : memref<1x32xf32, #tpu.memory_space<vmem>>, vector<1x32xf32>
    %11 = vector.broadcast %10 : vector<1x32xf32> to vector<2x32xf32>
    %12 = arith.addf %9, %11 : vector<2x32xf32>
    %cst_11 = arith.constant 0.000000e+00 : f32
    %13 = vector.broadcast %cst_11 : f32 to vector<2x32xf32>
    %14 = arith.maximumf %12, %13 : vector<2x32xf32>
    %c0_12 = arith.constant 0 : index
    %c0_13 = arith.constant 0 : index
    %15 = vector.load %arg6[%c0_12, %c0_13] : memref<32x48xf32, #tpu.memory_space<vmem>>, vector<32x48xf32>
    %cst_14 = arith.constant dense<0.000000e+00> : vector<2x48xf32>
    %16 = tpu.matmul %14, %15, %cst_14 {dimension_numbers = #tpu.dot_dimension_numbers<[1], [0], [0], [1], [0, 0, 1, 1], [], []>} : vector<2x32xf32>, vector<32x48xf32>, vector<2x48xf32> -> vector<2x48xf32>
    %c0_15 = arith.constant 0 : index
    %c0_16 = arith.constant 0 : index
    %17 = vector.load %arg7[%c0_15, %c0_16] : memref<1x48xf32, #tpu.memory_space<vmem>>, vector<1x48xf32>
    %18 = vector.broadcast %17 : vector<1x48xf32> to vector<2x48xf32>
    %19 = arith.addf %16, %18 : vector<2x48xf32>
    %c0_17 = arith.constant 0 : index
    %c0_18 = arith.constant 0 : index
    %20 = vector.load %arg8[%c0_17, %c0_18] : memref<2x48xf32, #tpu.memory_space<vmem>>, vector<2x48xf32>
    tpu.vector_store %arg8[%c0_17, %c0_18], %19 {strides = array<i32>} : memref<2x48xf32, #tpu.memory_space<vmem>>, vector<2x48xf32>,
    return
  }
  func.func @transform_0(%arg0: i32) -> (i32, i32) {
    %c0_i32 = arith.constant 0 : i32
    %c0_i32_0 = arith.constant 0 : i32
    return %arg0, %c0_i32 : i32, i32
  }
  func.func @transform_1(%arg0: i32) -> (i32, i32) {
    %c0_i32 = arith.constant 0 : i32
    %c0_i32_0 = arith.constant 0 : i32
    %c0_i32_1 = arith.constant 0 : i32
    return %c0_i32, %c0_i32_0 : i32, i32
  }
  func.func @transform_2(%arg0: i32) -> (i32, i32) {
    %c0_i32 = arith.constant 0 : i32
    %c0_i32_0 = arith.constant 0 : i32
    %c0_i32_1 = arith.constant 0 : i32
    return %c0_i32, %c0_i32_0 : i32, i32
  }
  func.func @transform_3(%arg0: i32) -> (i32, i32) {
    %c0_i32 = arith.constant 0 : i32
    %c0_i32_0 = arith.constant 0 : i32
    %c0_i32_1 = arith.constant 0 : i32
    return %c0_i32, %c0_i32_0 : i32, i32
  }
  func.func @transform_4(%arg0: i32) -> (i32, i32) {
    %c0_i32 = arith.constant 0 : i32
    %c0_i32_0 = arith.constant 0 : i32
    %c0_i32_1 = arith.constant 0 : i32
    return %c0_i32, %c0_i32_0 : i32, i32
  }
  func.func @transform_5(%arg0: i32) -> (i32, i32) {
    %c0_i32 = arith.constant 0 : i32
    %c0_i32_0 = arith.constant 0 : i32
    %c0_i32_1 = arith.constant 0 : i32
    return %c0_i32, %c0_i32_0 : i32, i32
  }
  func.func @transform_6(%arg0: i32) -> (i32, i32) {
    %c0_i32 = arith.constant 0 : i32
    %c0_i32_0 = arith.constant 0 : i32
    %c0_i32_1 = arith.constant 0 : i32
    return %c0_i32, %c0_i32_0 : i32, i32
  }
  func.func @transform_7(%arg0: i32) -> (i32, i32) {
    %c0_i32 = arith.constant 0 : i32
    %c0_i32_0 = arith.constant 0 : i32
    return %arg0, %c0_i32 : i32, i32
  }
}

</mosaic_0001>

<llo_original>
// kernel: tpu_custom_call.1
$region0: #{tpu_custom_call.1}
  #allocation0 [shape = 'u32[]', space=smem, size = 0x4, offset = 0x4, fixed_abs, tag = 'smem constant byte address 0x4 - core index']
  #allocation1 [shape = 'u32[144,128]{1,0:T(1,128)}', space=vmem, size = 0x12000, scoped, tag = 'internal scratch']
  %s0 = inlined_call_operand.vmem [shape: f32[2,1024], index: 0, kind: input, shape index: {}]
  %s1 = inlined_call_operand.vmem [shape: f32[1024,32], index: 1, kind: input, shape index: {}]
  %s2 = inlined_call_operand.vmem [shape: f32[1,32], index: 2, kind: input, shape index: {}]
  %s3 = inlined_call_operand.vmem [shape: f32[32,32], index: 3, kind: input, shape index: {}]
  %s4 = inlined_call_operand.vmem [shape: f32[1,32], index: 4, kind: input, shape index: {}]
  %s5 = inlined_call_operand.vmem [shape: f32[32,48], index: 5, kind: input, shape index: {}]
  %s6 = inlined_call_operand.vmem [shape: f32[1,48], index: 6, kind: input, shape index: {}]
  %s7 = inlined_call_operand.hbm [shape: f32[2,48], index: 7, kind: output, shape index: {}]
  %s8 = sld [smem:[#allocation0]]
  $region38: #{tpu_custom_call.1} parent=0
    _
  %s10 = ssub.s32 1, %s8
  %s11 = scalar_select 0, %s10, %s8
  $region1: #{tpu_custom_call.1} parent=0
    #allocation2 [shape = 'u8[1024]{0}', space=vmem, size = 0x400, scoped, tag = 'output window, operand 0, single buffered']
    #allocation3 [shape = 's32[1]{0}', space=sflag, size = 0x4, scoped, tag = 'scoped memory for tpu_custom_call.1']
    %12 = vsyncpa [#allocation3], 0
    // Predicated region
    $region2: #{tpu_custom_call.1} parent=1 // pred_check
      _
    $region3: #{tpu_custom_call.1} parent=1 // pred_check_branch
      %14 = sbr.rel (0) target = $region5
    $region4: #{tpu_custom_call.1} parent=1 // pred_region
      _
    $region5: #{tpu_custom_call.1} parent=1 // pred_fallthru
      _
    // Predicated region
    $region6: #{tpu_custom_call.1} parent=1 // pred_check
      _
    $region7: #{tpu_custom_call.1} parent=1 // pred_check_branch
      %16 = sbr.rel (0) target = $region9
    $region8: #{tpu_custom_call.1} parent=1 // pred_region
      _
    $region9: #{tpu_custom_call.1} parent=1 // pred_fallthru
      _
    // Predicated region
    $region10: #{tpu_custom_call.1} parent=1 // pred_check
      _
    $region11: #{tpu_custom_call.1} parent=1 // pred_check_branch
      %18 = sbr.rel (0) target = $region13
    $region12: #{tpu_custom_call.1} parent=1 // pred_region
      _
    $region13: #{tpu_custom_call.1} parent=1 // pred_fallthru
      _
    // Predicated region
    $region14: #{tpu_custom_call.1} parent=1 // pred_check
      _
    $region15: #{tpu_custom_call.1} parent=1 // pred_check_branch
      %20 = sbr.rel (0) target = $region17
    $region16: #{tpu_custom_call.1} parent=1 // pred_region
      _
    $region17: #{tpu_custom_call.1} parent=1 // pred_fallthru
      _
    // Predicated region
    $region18: #{tpu_custom_call.1} parent=1 // pred_check
      _
    $region19: #{tpu_custom_call.1} parent=1 // pred_check_branch
      %22 = sbr.rel (0) target = $region21
    $region20: #{tpu_custom_call.1} parent=1 // pred_region
      _
    $region21: #{tpu_custom_call.1} parent=1 // pred_fallthru
      _
    // Predicated region
    $region22: #{tpu_custom_call.1} parent=1 // pred_check
      _
    $region23: #{tpu_custom_call.1} parent=1 // pred_check_branch
      %24 = sbr.rel (0) target = $region25
    $region24: #{tpu_custom_call.1} parent=1 // pred_region
      _
    $region25: #{tpu_custom_call.1} parent=1 // pred_fallthru
      _
    // Predicated region
    $region26: #{tpu_custom_call.1} parent=1 // pred_check
      _
    $region27: #{tpu_custom_call.1} parent=1 // pred_check_branch
      %26 = sbr.rel (0) target = $region29
    $region28: #{tpu_custom_call.1} parent=1 // pred_region
      _
    $region29: #{tpu_custom_call.1} parent=1 // pred_fallthru
      _
    %v27 = vld [vmem:[%s0] sm:$0xff]
    %v28 = vld [vmem:[%s0 + $0x8] sm:$0xff]
    %v29 = vld [vmem:[%s1] sm:$0xff]
    %v30 = vld [vmem:[%s1 + $0x8] sm:$0xff]
    %v31 = vld [vmem:[%s1 + $0x10] sm:$0xff]
    %v32 = vld [vmem:[%s1 + $0x18] sm:$0xff]
    %v33 = vld [vmem:[%s1 + $0x20] sm:$0xff]
    %v34 = vld [vmem:[%s1 + $0x28] sm:$0xff]
    %v35 = vld [vmem:[%s1 + $0x30] sm:$0xff]
    %v36 = vld [vmem:[%s1 + $0x38] sm:$0xff]
    %v37 = vld [vmem:[%s1 + $0x40] sm:$0xff]
    %v38 = vld [vmem:[%s1 + $0x48] sm:$0xff]
    %v39 = vld [vmem:[%s1 + $0x50] sm:$0xff]
    %v40 = vld [vmem:[%s1 + $0x58] sm:$0xff]
    %v41 = vld [vmem:[%s1 + $0x60] sm:$0xff]
    %v42 = vld [vmem:[%s1 + $0x68] sm:$0xff]
    %v43 = vld [vmem:[%s1 + $0x70] sm:$0xff]
    %v44 = vld [vmem:[%s1 + $0x78] sm:$0xff]
    %v45 = vld [vmem:[%s1 + $0x80] sm:$0xff]
    %v46 = vld [vmem:[%s1 + $0x88] sm:$0xff]
    %v47 = vld [vmem:[%s1 + $0x90] sm:$0xff]
    %v48 = vld [vmem:[%s1 + $0x98] sm:$0xff]
    %v49 = vld [vmem:[%s1 + $0xa0] sm:$0xff]
    %v50 = vld [vmem:[%s1 + $0xa8] sm:$0xff]
    %v51 = vld [vmem:[%s1 + $0xb0] sm:$0xff]
    %v52 = vld [vmem:[%s1 + $0xb8] sm:$0xff]
    %v53 = vld [vmem:[%s1 + $0xc0] sm:$0xff]
    %v54 = vld [vmem:[%s1 + $0xc8] sm:$0xff]
    %v55 = vld [vmem:[%s1 + $0xd0] sm:$0xff]
    %v56 = vld [vmem:[%s1 + $0xd8] sm:$0xff]
    %v57 = vld [vmem:[%s1 + $0xe0] sm:$0xff]
    %v58 = vld [vmem:[%s1 + $0xe8] sm:$0xff]
    %v59 = vld [vmem:[%s1 + $0xf0] sm:$0xff]
    %v60 = vld [vmem:[%s1 + $0xf8] sm:$0xff]
    %v61 = vld [vmem:[%s1 + $0x100] sm:$0xff]
    %v62 = vld [vmem:[%s1 + $0x108] sm:$0xff]
    %v63 = vld [vmem:[%s1 + $0x110] sm:$0xff]
    %v64 = vld [vmem:[%s1 + $0x118] sm:$0xff]
    %v65 = vld [vmem:[%s1 + $0x120] sm:$0xff]
    %v66 = vld [vmem:[%s1 + $0x128] sm:$0xff]
    %v67 = vld [vmem:[%s1 + $0x130] sm:$0xff]
    %v68 = vld [vmem:[%s1 + $0x138] sm:$0xff]
    %v69 = vld [vmem:[%s1 + $0x140] sm:$0xff]
    %v70 = vld [vmem:[%s1 + $0x148] sm:$0xff]
    %v71 = vld [vmem:[%s1 + $0x150] sm:$0xff]
    %v72 = vld [vmem:[%s1 + $0x158] sm:$0xff]
    %v73 = vld [vmem:[%s1 + $0x160] sm:$0xff]
    %v74 = vld [vmem:[%s1 + $0x168] sm:$0xff]
    %v75 = vld [vmem:[%s1 + $0x170] sm:$0xff]
    %v76 = vld [vmem:[%s1 + $0x178] sm:$0xff]
    %v77 = vld [vmem:[%s1 + $0x180] sm:$0xff]
    %v78 = vld [vmem:[%s1 + $0x188] sm:$0xff]
    %v79 = vld [vmem:[%s1 + $0x190] sm:$0xff]
    %v80 = vld [vmem:[%s1 + $0x198] sm:$0xff]
    %v81 = vld [vmem:[%s1 + $0x1a0] sm:$0xff]
    %v82 = vld [vmem:[%s1 + $0x1a8] sm:$0xff]
    %v83 = vld [vmem:[%s1 + $0x1b0] sm:$0xff]
    %v84 = vld [vmem:[%s1 + $0x1b8] sm:$0xff]
    %v85 = vld [vmem:[%s1 + $0x1c0] sm:$0xff]
    %v86 = vld [vmem:[%s1 + $0x1c8] sm:$0xff]
    %v87 = vld [vmem:[%s1 + $0x1d0] sm:$0xff]
    %v88 = vld [vmem:[%s1 + $0x1d8] sm:$0xff]
    %v89 = vld [vmem:[%s1 + $0x1e0] sm:$0xff]
    %v90 = vld [vmem:[%s1 + $0x1e8] sm:$0xff]
    %v91 = vld [vmem:[%s1 + $0x1f0] sm:$0xff]
    %v92 = vld [vmem:[%s1 + $0x1f8] sm:$0xff]
    %v93 = vld [vmem:[%s1 + $0x200] sm:$0xff]
    %v94 = vld [vmem:[%s1 + $0x208] sm:$0xff]
    %v95 = vld [vmem:[%s1 + $0x210] sm:$0xff]
    %v96 = vld [vmem:[%s1 + $0x218] sm:$0xff]
    %v97 = vld [vmem:[%s1 + $0x220] sm:$0xff]
    %v98 = vld [vmem:[%s1 + $0x228] sm:$0xff]
    %v99 = vld [vmem:[%s1 + $0x230] sm:$0xff]
    %v100 = vld [vmem:[%s1 + $0x238] sm:$0xff]
    %v101 = vld [vmem:[%s1 + $0x240] sm:$0xff]
    %v102 = vld [vmem:[%s1 + $0x248] sm:$0xff]
    %v103 = vld [vmem:[%s1 + $0x250] sm:$0xff]
    %v104 = vld [vmem:[%s1 + $0x258] sm:$0xff]
    %v105 = vld [vmem:[%s1 + $0x260] sm:$0xff]
    %v106 = vld [vmem:[%s1 + $0x268] sm:$0xff]
    %v107 = vld [vmem:[%s1 + $0x270] sm:$0xff]
    %v108 = vld [vmem:[%s1 + $0x278] sm:$0xff]
    %v109 = vld [vmem:[%s1 + $0x280] sm:$0xff]
    %v110 = vld [vmem:[%s1 + $0x288] sm:$0xff]
    %v111 = vld [vmem:[%s1 + $0x290] sm:$0xff]
    %v112 = vld [vmem:[%s1 + $0x298] sm:$0xff]
    %v113 = vld [vmem:[%s1 + $0x2a0] sm:$0xff]
    %v114 = vld [vmem:[%s1 + $0x2a8] sm:$0xff]
    %v115 = vld [vmem:[%s1 + $0x2b0] sm:$0xff]
    %v116 = vld [vmem:[%s1 + $0x2b8] sm:$0xff]
    %v117 = vld [vmem:[%s1 + $0x2c0] sm:$0xff]
    %v118 = vld [vmem:[%s1 + $0x2c8] sm:$0xff]
    %v119 = vld [vmem:[%s1 + $0x2d0] sm:$0xff]
    %v120 = vld [vmem:[%s1 + $0x2d8] sm:$0xff]
    %v121 = vld [vmem:[%s1 + $0x2e0] sm:$0xff]
    %v122 = vld [vmem:[%s1 + $0x2e8] sm:$0xff]
    %v123 = vld [vmem:[%s1 + $0x2f0] sm:$0xff]
    %v124 = vld [vmem:[%s1 + $0x2f8] sm:$0xff]
    %v125 = vld [vmem:[%s1 + $0x300] sm:$0xff]
    %v126 = vld [vmem:[%s1 + $0x308] sm:$0xff]
    %v127 = vld [vmem:[%s1 + $0x310] sm:$0xff]
    %v128 = vld [vmem:[%s1 + $0x318] sm:$0xff]
    %v129 = vld [vmem:[%s1 + $0x320] sm:$0xff]
    %v130 = vld [vmem:[%s1 + $0x328] sm:$0xff]
    %v131 = vld [vmem:[%s1 + $0x330] sm:$0xff]
    %v132 = vld [vmem:[%s1 + $0x338] sm:$0xff]
    %v133 = vld [vmem:[%s1 + $0x340] sm:$0xff]
    %v134 = vld [vmem:[%s1 + $0x348] sm:$0xff]
    %v135 = vld [vmem:[%s1 + $0x350] sm:$0xff]
    %v136 = vld [vmem:[%s1 + $0x358] sm:$0xff]
    %v137 = vld [vmem:[%s1 + $0x360] sm:$0xff]
    %v138 = vld [vmem:[%s1 + $0x368] sm:$0xff]
    %v139 = vld [vmem:[%s1 + $0x370] sm:$0xff]
    %v140 = vld [vmem:[%s1 + $0x378] sm:$0xff]
    %v141 = vld [vmem:[%s1 + $0x380] sm:$0xff]
    %v142 = vld [vmem:[%s1 + $0x388] sm:$0xff]
    %v143 = vld [vmem:[%s1 + $0x390] sm:$0xff]
    %v144 = vld [vmem:[%s1 + $0x398] sm:$0xff]
    %v145 = vld [vmem:[%s1 + $0x3a0] sm:$0xff]
    %v146 = vld [vmem:[%s1 + $0x3a8] sm:$0xff]
    %v147 = vld [vmem:[%s1 + $0x3b0] sm:$0xff]
    %v148 = vld [vmem:[%s1 + $0x3b8] sm:$0xff]
    %v149 = vld [vmem:[%s1 + $0x3c0] sm:$0xff]
    %v150 = vld [vmem:[%s1 + $0x3c8] sm:$0xff]
    %v151 = vld [vmem:[%s1 + $0x3d0] sm:$0xff]
    %v152 = vld [vmem:[%s1 + $0x3d8] sm:$0xff]
    %v153 = vld [vmem:[%s1 + $0x3e0] sm:$0xff]
    %v154 = vld [vmem:[%s1 + $0x3e8] sm:$0xff]
    %v155 = vld [vmem:[%s1 + $0x3f0] sm:$0xff]
    %v156 = vld [vmem:[%s1 + $0x3f8] sm:$0xff]
    %v157 = vld [vmem:[%s2] sm:$0x1]
    %v159 = vlaneseq
    %v160 = vshrl.u32 %v159, 7
    %v161 = vsub.s32 0, %v160
    %v162 = vrot.slane %v157, %v161
    %v166 = vcombine.high %v27, %v27
    %v168 = vunpack.c.l.s4 1983009808
    %v169 = vunpack.c.0.s8 %v168
    %v170 = vlaneseq
    %v171 = vshrl.u32 %v170, 7
    %v172 = vsub.s32 %v169, %v171
    %v173 = vrot.slane %v27, %v172
    %v175 = vunpack.c.l.s4 1983009808
    %v176 = vunpack.c.0.s8 %v175
    %v177 = vlaneseq
    %v178 = vshrl.u32 %v177, 7
    %v179 = vsub.s32 %v176, %v178
    %v180 = vrot.slane %v166, %v179
    %v181 = vcombine.high %v173, %v173
    %v182 = vcombine.high %v180, %v180
    %v183 = vcombine.high %v28, %v28
    %v185 = vunpack.c.l.s4 1983009808
    %v186 = vunpack.c.0.s8 %v185
    %v187 = vlaneseq
    %v188 = vshrl.u32 %v187, 7
    %v189 = vsub.s32 %v186, %v188
    %v190 = vrot.slane %v28, %v189
    %v192 = vunpack.c.l.s4 1983009808
    %v193 = vunpack.c.0.s8 %v192
    %v194 = vlaneseq
    %v195 = vshrl.u32 %v194, 7
    %v196 = vsub.s32 %v193, %v195
    %v197 = vrot.slane %v183, %v196
    %v198 = vcombine.high %v190, %v190
    %v199 = vcombine.high %v197, %v197
    %208 = vmatprep.subr.mxu0 0.0
    %209 = vmatpush1.msra.mxu0 %v29
    %210 = vmatprep.subr.mxu0 0.0
    %211 = vmatpush1.msra.mxu0 %v30
    %212 = vmatprep.subr.mxu0 0.0
    %213 = vmatpush1.msra.mxu0 %v31
    %214 = vmatprep.subr.mxu0 0.0
    %215 = vmatpush1.msra.mxu0 %v32
    %216 = vmatprep.subr.mxu0 0.0
    %217 = vmatpush1.msra.mxu0 %v33
    %218 = vmatprep.subr.mxu0 0.0
    %219 = vmatpush1.msra.mxu0 %v34
    %220 = vmatprep.subr.mxu0 0.0
    %221 = vmatpush1.msra.mxu0 %v35
    %222 = vmatprep.subr.mxu0 0.0
    %223 = vmatpush1.msra.mxu0 %v36
    %224 = vmatprep.subr.mxu0 0.0
    %225 = vmatpush1.msra.mxu0 %v37
    %226 = vmatprep.subr.mxu0 0.0
    %227 = vmatpush1.msra.mxu0 %v38
    %228 = vmatprep.subr.mxu0 0.0
    %229 = vmatpush1.msra.mxu0 %v39
    %230 = vmatprep.subr.mxu0 0.0
    %231 = vmatpush1.msra.mxu0 %v40
    %232 = vmatprep.subr.mxu0 0.0
    %233 = vmatpush1.msra.mxu0 %v41
    %234 = vmatprep.subr.mxu0 0.0
    %235 = vmatpush1.msra.mxu0 %v42
    %236 = vmatprep.subr.mxu0 0.0
    %237 = vmatpush1.msra.mxu0 %v43
    %238 = vmatprep.subr.mxu0 0.0
    %239 = vmatpush1.msra.mxu0 %v44
    %240 = vmatprep.subr.mxu0 0.0
    %241 = vmatpush1.msra.mxu0 %v45
    %242 = vmatprep.subr.mxu0 0.0
    %243 = vmatpush1.msra.mxu0 %v46
    %244 = vmatprep.subr.mxu0 0.0
    %245 = vmatpush1.msra.mxu0 %v47
    %246 = vmatprep.subr.mxu0 0.0
    %247 = vmatpush1.msra.mxu0 %v48
    %248 = vmatprep.subr.mxu0 0.0
    %249 = vmatpush1.msra.mxu0 %v49
    %250 = vmatprep.subr.mxu0 0.0
    %251 = vmatpush1.msra.mxu0 %v50
    %252 = vmatprep.subr.mxu0 0.0
    %253 = vmatpush1.msra.mxu0 %v51
    %254 = vmatprep.subr.mxu0 0.0
    %255 = vmatpush1.msra.mxu0 %v52
    %256 = vmatprep.subr.mxu0 0.0
    %257 = vmatpush1.msra.mxu0 %v53
    %258 = vmatprep.subr.mxu0 0.0
    %259 = vmatpush1.msra.mxu0 %v54
    %260 = vmatprep.subr.mxu0 0.0
    %261 = vmatpush1.msra.mxu0 %v55
    %262 = vmatprep.subr.mxu0 0.0
    %263 = vmatpush1.msra.mxu0 %v56
    %264 = vmatprep.subr.mxu0 0.0
    %265 = vmatpush1.msra.mxu0 %v57
    %266 = vmatprep.subr.mxu0 0.0
    %267 = vmatpush1.msra.mxu0 %v58
    %268 = vmatprep.subr.mxu0 0.0
    %269 = vmatpush1.msra.mxu0 %v59
    %270 = vmatprep.subr.mxu0 0.0
    %271 = vmatpush1.msra.mxu0 %v60
    %272 = vmatprep.mubr.f32.mxu0 %v181
    %273 = vmatmul.mubr.f32.gmra.mrb[0].mxu0 %v173
    %v274 = vpop.f32.mrb[0].mxu0
    %v275 = vadd.f32 %v162, %v274
    %v276 = vpop.f32.mrb[0].mxu0
    %277 = vdwg.mxu0
    %278 = vmatprep.subr.mxu0 0.0
    %279 = vmatpush1.msra.mxu0 %v61
    %280 = vmatprep.subr.mxu0 0.0
    %281 = vmatpush1.msra.mxu0 %v62
    %282 = vmatprep.subr.mxu0 0.0
    %283 = vmatpush1.msra.mxu0 %v63
    %284 = vmatprep.subr.mxu0 0.0
    %285 = vmatpush1.msra.mxu0 %v64
    %286 = vmatprep.subr.mxu0 0.0
    %287 = vmatpush1.msra.mxu0 %v65
    %288 = vmatprep.subr.mxu0 0.0
    %289 = vmatpush1.msra.mxu0 %v66
    %290 = vmatprep.subr.mxu0 0.0
    %291 = vmatpush1.msra.mxu0 %v67
    %292 = vmatprep.subr.mxu0 0.0
    %293 = vmatpush1.msra.mxu0 %v68
    %294 = vmatprep.subr.mxu0 0.0
    %295 = vmatpush1.msra.mxu0 %v69
    %296 = vmatprep.subr.mxu0 0.0
    %297 = vmatpush1.msra.mxu0 %v70
    %298 = vmatprep.subr.mxu0 0.0
    %299 = vmatpush1.msra.mxu0 %v71
    %300 = vmatprep.subr.mxu0 0.0
    %301 = vmatpush1.msra.mxu0 %v72
    %302 = vmatprep.subr.mxu0 0.0
    %303 = vmatpush1.msra.mxu0 %v73
    %304 = vmatprep.subr.mxu0 0.0
    %305 = vmatpush1.msra.mxu0 %v74
    %306 = vmatprep.subr.mxu0 0.0
    %307 = vmatpush1.msra.mxu0 %v75
    %308 = vmatprep.subr.mxu0 0.0
    %309 = vmatpush1.msra.mxu0 %v76
    %310 = vmatprep.subr.mxu0 0.0
    %311 = vmatpush1.msra.mxu0 %v77
    %312 = vmatprep.subr.mxu0 0.0
    %313 = vmatpush1.msra.mxu0 %v78
    %314 = vmatprep.subr.mxu0 0.0
    %315 = vmatpush1.msra.mxu0 %v79
    %316 = vmatprep.subr.mxu0 0.0
    %317 = vmatpush1.msra.mxu0 %v80
    %318 = vmatprep.subr.mxu0 0.0
    %319 = vmatpush1.msra.mxu0 %v81
    %320 = vmatprep.subr.mxu0 0.0
    %321 = vmatpush1.msra.mxu0 %v82
    %322 = vmatprep.subr.mxu0 0.0
    %323 = vmatpush1.msra.mxu0 %v83
    %324 = vmatprep.subr.mxu0 0.0
    %325 = vmatpush1.msra.mxu0 %v84
    %326 = vmatprep.subr.mxu0 0.0
    %327 = vmatpush1.msra.mxu0 %v85
    %328 = vmatprep.subr.mxu0 0.0
    %329 = vmatpush1.msra.mxu0 %v86
    %330 = vmatprep.subr.mxu0 0.0
    %331 = vmatpush1.msra.mxu0 %v87
    %332 = vmatprep.subr.mxu0 0.0
    %333 = vmatpush1.msra.mxu0 %v88
    %334 = vmatprep.subr.mxu0 0.0
    %335 = vmatpush1.msra.mxu0 %v89
    %336 = vmatprep.subr.mxu0 0.0
    %337 = vmatpush1.msra.mxu0 %v90
    %338 = vmatprep.subr.mxu0 0.0
    %339 = vmatpush1.msra.mxu0 %v91
    %340 = vmatprep.subr.mxu0 0.0
    %341 = vmatpush1.msra.mxu0 %v92
    %342 = vmatprep.mubr.f32.mxu0 %v182
    %343 = vmatmul.mubr.f32.gmra.mrb[0].mxu0 %v180
    %v344 = vpop.f32.mrb[0].mxu0
    %v345 = vadd.f32 %v275, %v344
    %v346 = vpop.f32.mrb[0].mxu0
    %347 = vdwg.mxu0
    %348 = vmatprep.subr.mxu0 0.0
    %349 = vmatpush1.msra.mxu0 %v93
    %350 = vmatprep.subr.mxu0 0.0
    %351 = vmatpush1.msra.mxu0 %v94
    %352 = vmatprep.subr.mxu0 0.0
    %353 = vmatpush1.msra.mxu0 %v95
    %354 = vmatprep.subr.mxu0 0.0
    %355 = vmatpush1.msra.mxu0 %v96
    %356 = vmatprep.subr.mxu0 0.0
    %357 = vmatpush1.msra.mxu0 %v97
    %358 = vmatprep.subr.mxu0 0.0
    %359 = vmatpush1.msra.mxu0 %v98
    %360 = vmatprep.subr.mxu0 0.0
    %361 = vmatpush1.msra.mxu0 %v99
    %362 = vmatprep.subr.mxu0 0.0
    %363 = vmatpush1.msra.mxu0 %v100
    %364 = vmatprep.subr.mxu0 0.0
    %365 = vmatpush1.msra.mxu0 %v101
    %366 = vmatprep.subr.mxu0 0.0
    %367 = vmatpush1.msra.mxu0 %v102
    %368 = vmatprep.subr.mxu0 0.0
    %369 = vmatpush1.msra.mxu0 %v103
    %370 = vmatprep.subr.mxu0 0.0
    %371 = vmatpush1.msra.mxu0 %v104
    %372 = vmatprep.subr.mxu0 0.0
    %373 = vmatpush1.msra.mxu0 %v105
    %374 = vmatprep.subr.mxu0 0.0
    %375 = vmatpush1.msra.mxu0 %v106
    %376 = vmatprep.subr.mxu0 0.0
    %377 = vmatpush1.msra.mxu0 %v107
    %378 = vmatprep.subr.mxu0 0.0
    %379 = vmatpush1.msra.mxu0 %v108
    %380 = vmatprep.subr.mxu0 0.0
    %381 = vmatpush1.msra.mxu0 %v109
    %382 = vmatprep.subr.mxu0 0.0
    %383 = vmatpush1.msra.mxu0 %v110
    %384 = vmatprep.subr.mxu0 0.0
    %385 = vmatpush1.msra.mxu0 %v111
    %386 = vmatprep.subr.mxu0 0.0
    %387 = vmatpush1.msra.mxu0 %v112
    %388 = vmatprep.subr.mxu0 0.0
    %389 = vmatpush1.msra.mxu0 %v113
    %390 = vmatprep.subr.mxu0 0.0
    %391 = vmatpush1.msra.mxu0 %v114
    %392 = vmatprep.subr.mxu0 0.0
    %393 = vmatpush1.msra.mxu0 %v115
    %394 = vmatprep.subr.mxu0 0.0
    %395 = vmatpush1.msra.mxu0 %v116
    %396 = vmatprep.subr.mxu0 0.0
    %397 = vmatpush1.msra.mxu0 %v117
    %398 = vmatprep.subr.mxu0 0.0
    %399 = vmatpush1.msra.mxu0 %v118
    %400 = vmatprep.subr.mxu0 0.0
    %401 = vmatpush1.msra.mxu0 %v119
    %402 = vmatprep.subr.mxu0 0.0
    %403 = vmatpush1.msra.mxu0 %v120
    %404 = vmatprep.subr.mxu0 0.0
    %405 = vmatpush1.msra.mxu0 %v121
    %406 = vmatprep.subr.mxu0 0.0
    %407 = vmatpush1.msra.mxu0 %v122
    %408 = vmatprep.subr.mxu0 0.0
    %409 = vmatpush1.msra.mxu0 %v123
    %410 = vmatprep.subr.mxu0 0.0
    %411 = vmatpush1.msra.mxu0 %v124
    %412 = vmatprep.mubr.f32.mxu0 %v198
    %413 = vmatmul.mubr.f32.gmra.mrb[0].mxu0 %v190
    %v414 = vpop.f32.mrb[0].mxu0
    %v415 = vadd.f32 %v345, %v414
    %v416 = vpop.f32.mrb[0].mxu0
    %417 = vdwg.mxu0
    %418 = vmatprep.subr.mxu0 0.0
    %419 = vmatpush1.msra.mxu0 %v125
    %420 = vmatprep.subr.mxu0 0.0
    %421 = vmatpush1.msra.mxu0 %v126
    %422 = vmatprep.subr.mxu0 0.0
    %423 = vmatpush1.msra.mxu0 %v127
    %424 = vmatprep.subr.mxu0 0.0
    %425 = vmatpush1.msra.mxu0 %v128
    %426 = vmatprep.subr.mxu0 0.0
    %427 = vmatpush1.msra.mxu0 %v129
    %428 = vmatprep.subr.mxu0 0.0
    %429 = vmatpush1.msra.mxu0 %v130
    %430 = vmatprep.subr.mxu0 0.0
    %431 = vmatpush1.msra.mxu0 %v131
    %432 = vmatprep.subr.mxu0 0.0
    %433 = vmatpush1.msra.mxu0 %v132
    %434 = vmatprep.subr.mxu0 0.0
    %435 = vmatpush1.msra.mxu0 %v133
    %436 = vmatprep.subr.mxu0 0.0
    %437 = vmatpush1.msra.mxu0 %v134
    %438 = vmatprep.subr.mxu0 0.0
    %439 = vmatpush1.msra.mxu0 %v135
    %440 = vmatprep.subr.mxu0 0.0
    %441 = vmatpush1.msra.mxu0 %v136
    %442 = vmatprep.subr.mxu0 0.0
    %443 = vmatpush1.msra.mxu0 %v137
    %444 = vmatprep.subr.mxu0 0.0
    %445 = vmatpush1.msra.mxu0 %v138
    %446 = vmatprep.subr.mxu0 0.0
    %447 = vmatpush1.msra.mxu0 %v139
    %448 = vmatprep.subr.mxu0 0.0
    %449 = vmatpush1.msra.mxu0 %v140
    %450 = vmatprep.subr.mxu0 0.0
    %451 = vmatpush1.msra.mxu0 %v141
    %452 = vmatprep.subr.mxu0 0.0
    %453 = vmatpush1.msra.mxu0 %v142
    %454 = vmatprep.subr.mxu0 0.0
    %455 = vmatpush1.msra.mxu0 %v143
    %456 = vmatprep.subr.mxu0 0.0
    %457 = vmatpush1.msra.mxu0 %v144
    %458 = vmatprep.subr.mxu0 0.0
    %459 = vmatpush1.msra.mxu0 %v145
    %460 = vmatprep.subr.mxu0 0.0
    %461 = vmatpush1.msra.mxu0 %v146
    %462 = vmatprep.subr.mxu0 0.0
    %463 = vmatpush1.msra.mxu0 %v147
    %464 = vmatprep.subr.mxu0 0.0
    %465 = vmatpush1.msra.mxu0 %v148
    %466 = vmatprep.subr.mxu0 0.0
    %467 = vmatpush1.msra.mxu0 %v149
    %468 = vmatprep.subr.mxu0 0.0
    %469 = vmatpush1.msra.mxu0 %v150
    %470 = vmatprep.subr.mxu0 0.0
    %471 = vmatpush1.msra.mxu0 %v151
    %472 = vmatprep.subr.mxu0 0.0
    %473 = vmatpush1.msra.mxu0 %v152
    %474 = vmatprep.subr.mxu0 0.0
    %475 = vmatpush1.msra.mxu0 %v153
    %476 = vmatprep.subr.mxu0 0.0
    %477 = vmatpush1.msra.mxu0 %v154
    %478 = vmatprep.subr.mxu0 0.0
    %479 = vmatpush1.msra.mxu0 %v155
    %480 = vmatprep.subr.mxu0 0.0
    %481 = vmatpush1.msra.mxu0 %v156
    %482 = vmatprep.mubr.f32.mxu0 %v199
    %483 = vmatmul.mubr.f32.gmra.mrb[0].mxu0 %v197
    %v484 = vpop.f32.mrb[0].mxu0
    %v485 = vadd.f32 %v415, %v484
    %v486 = vpop.f32.mrb[0].mxu0
    %487 = vdwg.mxu0
    %v488 = vmax.f32 %v485, 0.0
    %v489 = vld [vmem:[%s3] sm:$0xff]
    %v490 = vld [vmem:[%s3 + $0x8] sm:$0xff]
    %v491 = vld [vmem:[%s3 + $0x10] sm:$0xff]
    %v492 = vld [vmem:[%s3 + $0x18] sm:$0xff]
    %v493 = vld [vmem:[%s4] sm:$0x1]
    %v495 = vlaneseq
    %v496 = vshrl.u32 %v495, 7
    %v497 = vsub.s32 0, %v496
    %v498 = vrot.slane %v493, %v497
    %vm500 = vcmask 261120
    %v502 = vsel %vm500, %v488, 0
    %504 = vmatprep.subr.mxu0 0.0
    %505 = vmatpush1.msra.mxu0 %v489
    %506 = vmatprep.subr.mxu0 0.0
    %507 = vmatpush1.msra.mxu0 %v490
    %508 = vmatprep.subr.mxu0 0.0
    %509 = vmatpush1.msra.mxu0 %v491
    %510 = vmatprep.subr.mxu0 0.0
    %511 = vmatpush1.msra.mxu0 %v492
    %512 = vmatprep.subr.mxu0 0.0
    %513 = vmatpush1.msra.mxu0 0.0
    %514 = vmatprep.subr.mxu0 0.0
    %515 = vmatpush1.msra.mxu0 0.0
    %516 = vmatprep.subr.mxu0 0.0
    %517 = vmatpush1.msra.mxu0 0.0
    %518 = vmatprep.subr.mxu0 0.0
    %519 = vmatpush1.msra.mxu0 0.0
    %520 = vmatprep.subr.mxu0 0.0
    %521 = vmatpush1.msra.mxu0 0.0
    %522 = vmatprep.subr.mxu0 0.0
    %523 = vmatpush1.msra.mxu0 0.0
    %524 = vmatprep.subr.mxu0 0.0
    %525 = vmatpush1.msra.mxu0 0.0
    %526 = vmatprep.subr.mxu0 0.0
    %527 = vmatpush1.msra.mxu0 0.0
    %528 = vmatprep.subr.mxu0 0.0
    %529 = vmatpush1.msra.mxu0 0.0
    %530 = vmatprep.subr.mxu0 0.0
    %531 = vmatpush1.msra.mxu0 0.0
    %532 = vmatprep.subr.mxu0 0.0
    %533 = vmatpush1.msra.mxu0 0.0
    %534 = vmatprep.subr.mxu0 0.0
    %535 = vmatpush1.msra.mxu0 0.0
    %536 = vmatprep.subr.mxu0 0.0
    %537 = vmatpush1.msra.mxu0 0.0
    %538 = vmatprep.subr.mxu0 0.0
    %539 = vmatpush1.msra.mxu0 0.0
    %540 = vmatprep.subr.mxu0 0.0
    %541 = vmatpush1.msra.mxu0 0.0
    %542 = vmatprep.subr.mxu0 0.0
    %543 = vmatpush1.msra.mxu0 0.0
    %544 = vmatprep.subr.mxu0 0.0
    %545 = vmatpush1.msra.mxu0 0.0
    %546 = vmatprep.subr.mxu0 0.0
    %547 = vmatpush1.msra.mxu0 0.0
    %548 = vmatprep.subr.mxu0 0.0
    %549 = vmatpush1.msra.mxu0 0.0
    %550 = vmatprep.subr.mxu0 0.0
    %551 = vmatpush1.msra.mxu0 0.0
    %552 = vmatprep.subr.mxu0 0.0
    %553 = vmatpush1.msra.mxu0 0.0
    %554 = vmatprep.subr.mxu0 0.0
    %555 = vmatpush1.msra.mxu0 0.0
    %556 = vmatprep.subr.mxu0 0.0
    %557 = vmatpush1.msra.mxu0 0.0
    %558 = vmatprep.subr.mxu0 0.0
    %559 = vmatpush1.msra.mxu0 0.0
    %560 = vmatprep.subr.mxu0 0.0
    %561 = vmatpush1.msra.mxu0 0.0
    %562 = vmatprep.subr.mxu0 0.0
    %563 = vmatpush1.msra.mxu0 0.0
    %564 = vmatprep.subr.mxu0 0.0
    %565 = vmatpush1.msra.mxu0 0.0
    %566 = vmatprep.subr.mxu0 0.0
    %567 = vmatpush1.msra.mxu0 0.0
    %568 = vmatprep.mubr.f32.mxu0 0.0
    %569 = vmatmul.mubr.f32.gmra.mrb[0].mxu0 %v502
    %v570 = vpop.f32.mrb[0].mxu0
    %v571 = vadd.f32 %v498, %v570
    %v572 = vpop.f32.mrb[0].mxu0
    %573 = vdwg.mxu0
    %v574 = vmax.f32 %v571, 0.0
    %v575 = vld [vmem:[%s5] sm:$0xff]
    %v576 = vld [vmem:[%s5 + $0x8] sm:$0xff]
    %v577 = vld [vmem:[%s5 + $0x10] sm:$0xff]
    %v578 = vld [vmem:[%s5 + $0x18] sm:$0xff]
    %v579 = vld [vmem:[%s6] sm:$0x1]
    %v581 = vlaneseq
    %v582 = vshrl.u32 %v581, 7
    %v583 = vsub.s32 0, %v582
    %v584 = vrot.slane %v579, %v583
    %v587 = vsel %vm500, %v574, 0
    %589 = vmatprep.subr.mxu0 0.0
    %590 = vmatpush1.msra.mxu0 %v575
    %591 = vmatprep.subr.mxu0 0.0
    %592 = vmatpush1.msra.mxu0 %v576
    %593 = vmatprep.subr.mxu0 0.0
    %594 = vmatpush1.msra.mxu0 %v577
    %595 = vmatprep.subr.mxu0 0.0
    %596 = vmatpush1.msra.mxu0 %v578
    %597 = vmatprep.subr.mxu0 0.0
    %598 = vmatpush1.msra.mxu0 0.0
    %599 = vmatprep.subr.mxu0 0.0
    %600 = vmatpush1.msra.mxu0 0.0
    %601 = vmatprep.subr.mxu0 0.0
    %602 = vmatpush1.msra.mxu0 0.0
    %603 = vmatprep.subr.mxu0 0.0
    %604 = vmatpush1.msra.mxu0 0.0
    %605 = vmatprep.subr.mxu0 0.0
    %606 = vmatpush1.msra.mxu0 0.0
    %607 = vmatprep.subr.mxu0 0.0
    %608 = vmatpush1.msra.mxu0 0.0
    %609 = vmatprep.subr.mxu0 0.0
    %610 = vmatpush1.msra.mxu0 0.0
    %611 = vmatprep.subr.mxu0 0.0
    %612 = vmatpush1.msra.mxu0 0.0
    %613 = vmatprep.subr.mxu0 0.0
    %614 = vmatpush1.msra.mxu0 0.0
    %615 = vmatprep.subr.mxu0 0.0
    %616 = vmatpush1.msra.mxu0 0.0
    %617 = vmatprep.subr.mxu0 0.0
    %618 = vmatpush1.msra.mxu0 0.0
    %619 = vmatprep.subr.mxu0 0.0
    %620 = vmatpush1.msra.mxu0 0.0
    %621 = vmatprep.subr.mxu0 0.0
    %622 = vmatpush1.msra.mxu0 0.0
    %623 = vmatprep.subr.mxu0 0.0
    %624 = vmatpush1.msra.mxu0 0.0
    %625 = vmatprep.subr.mxu0 0.0
    %626 = vmatpush1.msra.mxu0 0.0
    %627 = vmatprep.subr.mxu0 0.0
    %628 = vmatpush1.msra.mxu0 0.0
    %629 = vmatprep.subr.mxu0 0.0
    %630 = vmatpush1.msra.mxu0 0.0
    %631 = vmatprep.subr.mxu0 0.0
    %632 = vmatpush1.msra.mxu0 0.0
    %633 = vmatprep.subr.mxu0 0.0
    %634 = vmatpush1.msra.mxu0 0.0
    %635 = vmatprep.subr.mxu0 0.0
    %636 = vmatpush1.msra.mxu0 0.0
    %637 = vmatprep.subr.mxu0 0.0
    %638 = vmatpush1.msra.mxu0 0.0
    %639 = vmatprep.subr.mxu0 0.0
    %640 = vmatpush1.msra.mxu0 0.0
    %641 = vmatprep.subr.mxu0 0.0
    %642 = vmatpush1.msra.mxu0 0.0
    %643 = vmatprep.subr.mxu0 0.0
    %644 = vmatpush1.msra.mxu0 0.0
    %645 = vmatprep.subr.mxu0 0.0
    %646 = vmatpush1.msra.mxu0 0.0
    %647 = vmatprep.subr.mxu0 0.0
    %648 = vmatpush1.msra.mxu0 0.0
    %649 = vmatprep.subr.mxu0 0.0
    %650 = vmatpush1.msra.mxu0 0.0
    %651 = vmatprep.subr.mxu0 0.0
    %652 = vmatpush1.msra.mxu0 0.0
    %653 = vmatprep.mubr.f32.mxu0 0.0
    %654 = vmatmul.mubr.f32.gmra.mrb[0].mxu0 %v587
    %v655 = vpop.f32.mrb[0].mxu0
    %v656 = vadd.f32 %v584, %v655
    %v657 = vpop.f32.mrb[0].mxu0
    %658 = vdwg.mxu0
    %vm659 = vcmask 386048
    %660 = vst.msk [vmem:[#allocation2] sm:$0x3] %vm659, %v656
    // Predicated region
    $region30: #{tpu_custom_call.1} parent=1 // pred_check
      _
    $region31: #{tpu_custom_call.1} parent=1 // pred_check_branch
      %662 = sbr.rel (0) target = $region33
    $region32: #{tpu_custom_call.1} parent=1 // pred_region
      %s664 = ssub.s32 32, 32
      %665 = vsyncadd [#allocation3], %s664
      %s667 = sshll.u32 [#allocation2], 4
      %s668 = int_to_ptr.vmem [resolvable:$true] %s667
      %670 = dma.vmem_to_hbm [thread:$0]  %s668, 32, %s7, [#allocation3]
    $region33: #{tpu_custom_call.1} parent=1 // pred_fallthru
      _
    // Predicated region
    $region34: #{tpu_custom_call.1} parent=1 // pred_check
      _
    $region35: #{tpu_custom_call.1} parent=1 // pred_check_branch
      %672 = sbr.rel (0) target = $region37
    $region36: #{tpu_custom_call.1} parent=1 // pred_region
      %673 = dma.done [#allocation3], 32
    $region37: #{tpu_custom_call.1} parent=1 // pred_fallthru
      _
    %674 = vsyncpa [#allocation3], 1

</llo_original>
